<compile_context>
chip_gen: v6e
topology: v6e:2x2x1
jax: 0.10.0
libtpu: 0.0.40
codegen_flags: <defaults>
</compile_context>

<pallas_src>
import functools

import jax
import jax.numpy as jnp
from jax.experimental import pallas as pl
from jax.experimental.pallas import tpu as pltpu


def _highway_kernel(x_ref, w_ref, b_ref, o_ref):
    """One row-tile of the highway block.

    x_ref : (br, K)   input rows (K = pack * E, lane-dense when packed)
    w_ref : (K, 2K)   fused weights  [blockdiag(Wp^T) | blockdiag(Wg^T)]
    b_ref : (1, 2K)   fused biases   [tiled bp        | tiled bg       ]
    o_ref : (br, K)   output rows
    """
    x = x_ref[...].astype(jnp.float32)
    k = x.shape[-1]

    # Single fused MXU matmul covering both the proj and gate branches.
    pg = jnp.dot(x, w_ref[...].astype(jnp.float32),
                 preferred_element_type=jnp.float32)
    pg = pg + b_ref[...]

    x_proj = jnp.maximum(pg[:, :k], 0.0)   # relu branch (lane-aligned slice)
    x_gate = jax.nn.sigmoid(pg[:, k:])     # sigmoid branch (EUP)

    # x + g * (p - x)  ==  g*p + (1-g)*x, with one fewer multiply / temporary.
    out = x + x_gate * (x_proj - x)
    o_ref[...] = out.astype(o_ref.dtype)


def prepare_highway_params(w_proj, b_proj, w_gate, b_gate):
    """One-time weight prep (hoisted out of the per-forward-call path).

    Returns (w_fused, b_fused, pack):
      pack    : logical rows packed per 128-lane row (1 when E >= 128)
      w_fused : (pack*E, 2*pack*E) = [kron(I, Wp^T) | kron(I, Wg^T)]
      b_fused : (1, 2*pack*E)      = [tile(bp, pack) | tile(bg, pack)]
    """
    E = w_proj.shape[0]
    if E < 128 and 128 % E == 0:
        pack = 128 // E            # lane-dense packing (e.g. E=32 -> pack=4)
    else:
        pack = 1

    eye = jnp.eye(pack, dtype=w_proj.dtype)
    wp_blk = jnp.kron(eye, w_proj.T)           # (pack*E, pack*E)
    wg_blk = jnp.kron(eye, w_gate.T)           # (pack*E, pack*E)
    w_fused = jnp.concatenate([wp_blk, wg_blk], axis=1)          # (K, 2K)
    b_fused = jnp.concatenate(
        [jnp.tile(b_proj, pack), jnp.tile(b_gate, pack)]
    ).reshape(1, -1).astype(jnp.float32)                          # (1, 2K)
    return w_fused, b_fused, pack


def _choose_block_rows(n_rows, k):
    """Row tile: large enough to pipeline, small enough for every gen's VMEM."""
    if n_rows <= 8:
        return n_rows
    # Keep the row-dependent VMEM (x + out double-buffered + f32 temporaries)
    # comfortably inside the default scoped-VMEM limit on v5e/v6e/v7x.
    budget_bytes = 10 * 1024 * 1024
    per_row_bytes = 32 * k                    # ~(2+2) dbuf f32 tiles + temps
    cap = max(8, budget_bytes // per_row_bytes)
    br = min(n_rows, 1024, cap)
    br = max(8, (br // 8) * 8)                # sublane-aligned for f32
    return br


@functools.partial(jax.jit, static_argnames=("pack", "block_rows"))
def highway_forward(x, w_fused, b_fused, pack=1, block_rows=None):
    """x: (..., E).  w_fused/b_fused/pack from prepare_highway_params()."""
    orig_shape = x.shape
    E = orig_shape[-1]
    x2d = x.reshape(-1, E)
    n = x2d.shape[0]

    # Lane-dense packing: `pack` logical rows per 128-lane row (free reshape).
    pad = (-n) % pack
    if pad:
        x2d = jnp.pad(x2d, ((0, pad), (0, 0)))
    rows = (n + pad) // pack
    K = pack * E
    xk = x2d.reshape(rows, K)

    if block_rows is None:
        block_rows = _choose_block_rows(rows, K)
    grid = (pl.cdiv(rows, block_rows),)

    cost = pl.CostEstimate(
        flops=2 * rows * K * 2 * K,
        transcendentals=rows * K,                       # sigmoid
        bytes_accessed=(2 * rows * K * x.dtype.itemsize
                        + w_fused.size * w_fused.dtype.itemsize
                        + b_fused.size * 4),
    )

    # NOTE: weights/bias use a constant index_map; pl.Buffered(1) could halve
    # their resident VMEM, but they are tiny here so we keep default buffering.
    out = pl.pallas_call(
        _highway_kernel,
        out_shape=jax.ShapeDtypeStruct((rows, K), x.dtype),
        grid_spec=pltpu.PrefetchScalarGridSpec(
            num_scalar_prefetch=0,
            grid=grid,
            in_specs=[
                pl.BlockSpec((block_rows, K), lambda i: (i, 0)),   # x rows (pipelined)
                pl.BlockSpec((K, 2 * K), lambda i: (0, 0)),        # fused weights
                pl.BlockSpec((1, 2 * K), lambda i: (0, 0)),        # fused bias
            ],
            out_specs=pl.BlockSpec((block_rows, K), lambda i: (i, 0)),
        ),
        compiler_params=pltpu.CompilerParams(
            dimension_semantics=("parallel",),
        ),
        cost_estimate=cost,
    )(xk, w_fused, b_fused)

    out = out.reshape(rows * pack, E)
    if pad:
        out = out[:n]
    return out.reshape(orig_shape)


def init_highway_params(key, word_embed_size, init_gate_bias_mean=-1.0):
    """Deterministic init mimicking nn.Linear default (uniform +/- 1/sqrt(E))."""
    E = word_embed_size
    bound = 1.0 / (E ** 0.5)
    k1, k2, k3, k4 = jax.random.split(key, 4)
    w_proj = jax.random.uniform(k1, (E, E), jnp.float32, -bound, bound)
    b_proj = jax.random.uniform(k2, (E,), jnp.float32, -bound, bound)
    w_gate = jax.random.uniform(k3, (E, E), jnp.float32, -bound, bound)
    b_gate = jax.random.uniform(k4, (E,), jnp.float32, -bound, bound) + init_gate_bias_mean
    return w_proj, b_proj, w_gate, b_gate


def highway_ref(x, w_proj, b_proj, w_gate, b_gate):
    """Pure-JAX reference matching the PyTorch forward."""
    x_proj = jax.nn.relu(x @ w_proj.T + b_proj)
    x_gate = jax.nn.sigmoid(x @ w_gate.T + b_gate)
    return x_gate * x_proj + (1.0 - x_gate) * x


if __name__ == "__main__":
    key = jax.random.PRNGKey(0)
    kx, kp = jax.random.split(key)

    batch, seq, E = 2, 8, 32                      # word_embed_size = 32
    x = jax.random.normal(kx, (batch, seq, E), jnp.float32)
    w_proj, b_proj, w_gate, b_gate = init_highway_params(kp, E, init_gate_bias_mean=-1.0)

    # One-time weight prep (outside the jitted per-call path).
    w_fused, b_fused, pack = prepare_highway_params(w_proj, b_proj, w_gate, b_gate)
    w_fused = jax.block_until_ready(w_fused)

    out = highway_forward(x, w_fused, b_fused, pack=pack)
    out = jax.block_until_ready(out)

    ref = highway_ref(x, w_proj, b_proj, w_gate, b_gate)
    assert out.shape == x.shape and out.dtype == x.dtype
    assert jnp.allclose(out, ref, atol=1e-5, rtol=1e-5), "mismatch vs reference"

    # A second call exercising a multi-step pipelined row grid (grid=(4,)).
    x2 = jax.random.normal(kx, (4, 64, E), jnp.float32)
    out2 = jax.block_until_ready(
        highway_forward(x2, w_fused, b_fused, pack=pack, block_rows=16))
    ref2 = highway_ref(x2, w_proj, b_proj, w_gate, b_gate)
    assert jnp.allclose(out2, ref2, atol=1e-5, rtol=1e-5), "mismatch vs reference (tiled)"

    print("KERNEL_OK")
</pallas_src>

<mosaic_0001>
module attributes {stable_mosaic.version = 11 : i64} {
  func.func @_highway_kernel(%arg0: i32, %arg1: memref<4x128xf32, #tpu.memory_space<vmem>>, %arg2: memref<128x256xf32, #tpu.memory_space<vmem>>, %arg3: memref<1x256xf32, #tpu.memory_space<vmem>>, %arg4: memref<4x128xf32, #tpu.memory_space<vmem>>) attributes {dimension_semantics = [#tpu.dimension_semantics<parallel>], iteration_bounds = array<i64: 1>, scalar_prefetch = 0 : i64, scratch_operands = 0 : i64, tpu.core_type = #tpu.core_type<tc>, window_params = [{transform_indices = @transform_0, window_bounds = array<i64: 4, 128>}, {pipeline_mode = #tpu.pipeline_mode<synchronous>, transform_indices = @transform_1, window_bounds = array<i64: 128, 256>}, {pipeline_mode = #tpu.pipeline_mode<synchronous>, transform_indices = @transform_2, window_bounds = array<i64: 1, 256>}, {transform_indices = @transform_3, window_bounds = array<i64: 4, 128>}]} {
    %c0 = arith.constant 0 : index
    %c0_0 = arith.constant 0 : index
    %0 = vector.load %arg1[%c0, %c0_0] : memref<4x128xf32, #tpu.memory_space<vmem>>, vector<4x128xf32>
    %c0_1 = arith.constant 0 : index
    %c0_2 = arith.constant 0 : index
    %1 = vector.load %arg2[%c0_1, %c0_2] : memref<128x256xf32, #tpu.memory_space<vmem>>, vector<128x256xf32>
    %cst = arith.constant dense<0.000000e+00> : vector<4x256xf32>
    %2 = tpu.matmul %0, %1, %cst {dimension_numbers = #tpu.dot_dimension_numbers<[1], [0], [0], [1], [0, 0, 1, 1], [], []>} : vector<4x128xf32>, vector<128x256xf32>, vector<4x256xf32> -> vector<4x256xf32>
    %c0_3 = arith.constant 0 : index
    %c0_4 = arith.constant 0 : index
    %3 = vector.load %arg3[%c0_3, %c0_4] : memref<1x256xf32, #tpu.memory_space<vmem>>, vector<1x256xf32>
    %4 = vector.broadcast %3 : vector<1x256xf32> to vector<4x256xf32>
    %5 = arith.addf %2, %4 : vector<4x256xf32>
    %6 = vector.extract_strided_slice %5 {offsets = [0, 0], sizes = [4, 128], strides = [1, 1]} : vector<4x256xf32> to vector<4x128xf32>
    %cst_5 = arith.constant 0.000000e+00 : f32
    %7 = vector.broadcast %cst_5 : f32 to vector<4x128xf32>
    %8 = arith.maximumf %6, %7 : vector<4x128xf32>
    %9 = vector.extract_strided_slice %5 {offsets = [0, 128], sizes = [4, 128], strides = [1, 1]} : vector<4x256xf32> to vector<4x128xf32>
    %10 = arith.negf %9 : vector<4x128xf32>
    %11 = math.exp %10 : vector<4x128xf32>
    %cst_6 = arith.constant 1.000000e+00 : f32
    %12 = vector.broadcast %cst_6 : f32 to vector<4x128xf32>
    %13 = arith.addf %12, %11 : vector<4x128xf32>
    %14 = arith.divf %12, %13 : vector<4x128xf32>
    %15 = arith.subf %8, %0 : vector<4x128xf32>
    %16 = arith.mulf %14, %15 : vector<4x128xf32>
    %17 = arith.addf %0, %16 : vector<4x128xf32>
    %c0_7 = arith.constant 0 : index
    %c0_8 = arith.constant 0 : index
    %18 = vector.load %arg4[%c0_7, %c0_8] : memref<4x128xf32, #tpu.memory_space<vmem>>, vector<4x128xf32>
    tpu.vector_store %arg4[%c0_7, %c0_8], %17 {strides = array<i32>} : memref<4x128xf32, #tpu.memory_space<vmem>>, vector<4x128xf32>,
    return
  }
  func.func @transform_0(%arg0: i32) -> (i32, i32) {
    %c0_i32 = arith.constant 0 : i32
    %c0_i32_0 = arith.constant 0 : i32
    return %arg0, %c0_i32 : i32, i32
  }
  func.func @transform_1(%arg0: i32) -> (i32, i32) {
    %c0_i32 = arith.constant 0 : i32
    %c0_i32_0 = arith.constant 0 : i32
    %c0_i32_1 = arith.constant 0 : i32
    return %c0_i32, %c0_i32_0 : i32, i32
  }
  func.func @transform_2(%arg0: i32) -> (i32, i32) {
    %c0_i32 = arith.constant 0 : i32
    %c0_i32_0 = arith.constant 0 : i32
    %c0_i32_1 = arith.constant 0 : i32
    return %c0_i32, %c0_i32_0 : i32, i32
  }
  func.func @transform_3(%arg0: i32) -> (i32, i32) {
    %c0_i32 = arith.constant 0 : i32
    %c0_i32_0 = arith.constant 0 : i32
    return %arg0, %c0_i32 : i32, i32
  }
}

</mosaic_0001>

<llo_original>
// kernel: highway_forward.1
$region0: #{highway_forward.1}
  #allocation0 [shape = 'u32[]', space=smem, size = 0x4, offset = 0x4, fixed_abs, tag = 'smem constant byte address 0x4 - core index']
  #allocation1 [shape = 'u32[144,128]{1,0:T(1,128)}', space=vmem, size = 0x12000, scoped, tag = 'internal scratch']
  %s0 = inlined_call_operand.vmem [shape: f32[4,128], index: 0, kind: input, shape index: {}]
  %s1 = inlined_call_operand.hbm [shape: f32[128,256], index: 1, kind: input, shape index: {}]
  %s2 = inlined_call_operand.vmem [shape: f32[1,256], index: 2, kind: input, shape index: {}]
  %s3 = inlined_call_operand.vmem [shape: f32[4,128], index: 3, kind: output, shape index: {}]
  %s4 = sld [smem:[#allocation0]]
  $region26: #{highway_forward.1} parent=0
    _
  %s6 = ssub.s32 1, %s4
  %s7 = scalar_select 0, %s6, %s4
  $region1: #{highway_forward.1} parent=0
    #allocation2 [shape = 'u8[131072]{0}', space=vmem, size = 0x20000, scoped, tag = 'input window, operand 1, single buffered']
    #allocation3 [shape = 's32[1]{0}', space=sflag, size = 0x4, scoped, tag = 'scoped memory for highway_forward.1']
    %8 = vsyncpa [#allocation3], 0
    // Predicated region
    $region2: #{highway_forward.1} parent=1 // pred_check
      _
    $region3: #{highway_forward.1} parent=1 // pred_check_branch
      %10 = sbr.rel (0) target = $region5
    $region4: #{highway_forward.1} parent=1 // pred_region
      _
    $region5: #{highway_forward.1} parent=1 // pred_fallthru
      _
    // Predicated region
    $region6: #{highway_forward.1} parent=1 // pred_check
      _
    $region7: #{highway_forward.1} parent=1 // pred_check_branch
      %12 = sbr.rel (0) target = $region9
    $region8: #{highway_forward.1} parent=1 // pred_region
      %s14 = ssub.s32 4096, 4096
      %15 = vsyncadd [#allocation3], %s14
      %s16 = sshll.u32 [#allocation2], 4
      %s17 = int_to_ptr.vmem [resolvable:$true] %s16
      %22 = dma.hbm_to_vmem [thread:$0]  %s1, 4096, %s17, [#allocation3], 256, 256, 16
    $region9: #{highway_forward.1} parent=1 // pred_fallthru
      _
    // Predicated region
    $region10: #{highway_forward.1} parent=1 // pred_check
      _
    $region11: #{highway_forward.1} parent=1 // pred_check_branch
      %24 = sbr.rel (0) target = $region13
    $region12: #{highway_forward.1} parent=1 // pred_region
      _
    $region13: #{highway_forward.1} parent=1 // pred_fallthru
      _
    // Predicated region
    $region14: #{highway_forward.1} parent=1 // pred_check
      _
    $region15: #{highway_forward.1} parent=1 // pred_check_branch
      %26 = sbr.rel (0) target = $region17
    $region16: #{highway_forward.1} parent=1 // pred_region
      %27 = dma.done [#allocation3], 4096
    $region17: #{highway_forward.1} parent=1 // pred_fallthru
      _
    %v28 = vld [vmem:[%s0] sm:$0xf]
    %v29 = vld [vmem:[#allocation2] sm:$0xff]
    %v30 = vld [vmem:[#allocation2 + $0x8] sm:$0xff]
    %v31 = vld [vmem:[#allocation2 + $0x10] sm:$0xff]
    %v32 = vld [vmem:[#allocation2 + $0x18] sm:$0xff]
    %v33 = vld [vmem:[#allocation2 + $0x20] sm:$0xff]
    %v34 = vld [vmem:[#allocation2 + $0x28] sm:$0xff]
    %v35 = vld [vmem:[#allocation2 + $0x30] sm:$0xff]
    %v36 = vld [vmem:[#allocation2 + $0x38] sm:$0xff]
    %v37 = vld [vmem:[#allocation2 + $0x40] sm:$0xff]
    %v38 = vld [vmem:[#allocation2 + $0x48] sm:$0xff]
    %v39 = vld [vmem:[#allocation2 + $0x50] sm:$0xff]
    %v40 = vld [vmem:[#allocation2 + $0x58] sm:$0xff]
    %v41 = vld [vmem:[#allocation2 + $0x60] sm:$0xff]
    %v42 = vld [vmem:[#allocation2 + $0x68] sm:$0xff]
    %v43 = vld [vmem:[#allocation2 + $0x70] sm:$0xff]
    %v44 = vld [vmem:[#allocation2 + $0x78] sm:$0xff]
    %v45 = vld [vmem:[#allocation2 + $0x80] sm:$0xff]
    %v46 = vld [vmem:[#allocation2 + $0x88] sm:$0xff]
    %v47 = vld [vmem:[#allocation2 + $0x90] sm:$0xff]
    %v48 = vld [vmem:[#allocation2 + $0x98] sm:$0xff]
    %v49 = vld [vmem:[#allocation2 + $0xa0] sm:$0xff]
    %v50 = vld [vmem:[#allocation2 + $0xa8] sm:$0xff]
    %v51 = vld [vmem:[#allocation2 + $0xb0] sm:$0xff]
    %v52 = vld [vmem:[#allocation2 + $0xb8] sm:$0xff]
    %v53 = vld [vmem:[#allocation2 + $0xc0] sm:$0xff]
    %v54 = vld [vmem:[#allocation2 + $0xc8] sm:$0xff]
    %v55 = vld [vmem:[#allocation2 + $0xd0] sm:$0xff]
    %v56 = vld [vmem:[#allocation2 + $0xd8] sm:$0xff]
    %v57 = vld [vmem:[#allocation2 + $0xe0] sm:$0xff]
    %v58 = vld [vmem:[#allocation2 + $0xe8] sm:$0xff]
    %v59 = vld [vmem:[#allocation2 + $0xf0] sm:$0xff]
    %v60 = vld [vmem:[#allocation2 + $0xf8] sm:$0xff]
    %v61 = vld [vmem:[%s2] sm:$0x3]
    %v63 = vlaneseq
    %v64 = vshrl.u32 %v63, 7
    %v65 = vsub.s32 0, %v64
    %v66 = vrot.slane %v61, %v65
    %v67 = vlaneseq
    %v68 = vshrl.u32 %v67, 7
    %v69 = vsub.s32 1, %v68
    %v70 = vrot.slane %v61, %v69
    %73 = vmatprep.subr.mxu0 %v60
    %74 = vmatpush1.msra.mxu0 %v59
    %75 = vmatprep.subr.mxu0 %v58
    %76 = vmatpush1.msra.mxu0 %v57
    %77 = vmatprep.subr.mxu0 %v56
    %78 = vmatpush1.msra.mxu0 %v55
    %79 = vmatprep.subr.mxu0 %v54
    %80 = vmatpush1.msra.mxu0 %v53
    %81 = vmatprep.subr.mxu0 %v52
    %82 = vmatpush1.msra.mxu0 %v51
    %83 = vmatprep.subr.mxu0 %v50
    %84 = vmatpush1.msra.mxu0 %v49
    %85 = vmatprep.subr.mxu0 %v48
    %86 = vmatpush1.msra.mxu0 %v47
    %87 = vmatprep.subr.mxu0 %v46
    %88 = vmatpush1.msra.mxu0 %v45
    %89 = vmatprep.subr.mxu0 %v44
    %90 = vmatpush1.msra.mxu0 %v43
    %91 = vmatprep.subr.mxu0 %v42
    %92 = vmatpush1.msra.mxu0 %v41
    %93 = vmatprep.subr.mxu0 %v40
    %94 = vmatpush1.msra.mxu0 %v39
    %95 = vmatprep.subr.mxu0 %v38
    %96 = vmatpush1.msra.mxu0 %v37
    %97 = vmatprep.subr.mxu0 %v36
    %98 = vmatpush1.msra.mxu0 %v35
    %99 = vmatprep.subr.mxu0 %v34
    %100 = vmatpush1.msra.mxu0 %v33
    %101 = vmatprep.subr.mxu0 %v32
    %102 = vmatpush1.msra.mxu0 %v31
    %103 = vmatprep.subr.mxu0 %v30
    %104 = vmatpush1.msra.mxu0 %v29
    %105 = vmatprep.subr.mxu0 0.0
    %106 = vmatpush2.msra.mxu0 0.0
    %107 = vmatprep.subr.mxu0 0.0
    %108 = vmatpush2.msra.mxu0 0.0
    %109 = vmatprep.subr.mxu0 0.0
    %110 = vmatpush2.msra.mxu0 0.0
    %111 = vmatprep.subr.mxu0 0.0
    %112 = vmatpush2.msra.mxu0 0.0
    %113 = vmatprep.subr.mxu0 0.0
    %114 = vmatpush2.msra.mxu0 0.0
    %115 = vmatprep.subr.mxu0 0.0
    %116 = vmatpush2.msra.mxu0 0.0
    %117 = vmatprep.subr.mxu0 0.0
    %118 = vmatpush2.msra.mxu0 0.0
    %119 = vmatprep.subr.mxu0 0.0
    %120 = vmatpush2.msra.mxu0 0.0
    %121 = vmatprep.subr.mxu0 0.0
    %122 = vmatpush2.msra.mxu0 0.0
    %123 = vmatprep.subr.mxu0 0.0
    %124 = vmatpush2.msra.mxu0 0.0
    %125 = vmatprep.subr.mxu0 0.0
    %126 = vmatpush2.msra.mxu0 0.0
    %127 = vmatprep.subr.mxu0 0.0
    %128 = vmatpush2.msra.mxu0 0.0
    %129 = vmatprep.subr.mxu0 0.0
    %130 = vmatpush2.msra.mxu0 0.0
    %131 = vmatprep.subr.mxu0 0.0
    %132 = vmatpush2.msra.mxu0 0.0
    %133 = vmatprep.subr.mxu0 0.0
    %134 = vmatpush2.msra.mxu0 0.0
    %135 = vmatprep.subr.mxu0 0.0
    %136 = vmatpush2.msra.mxu0 0.0
    %137 = vmatprep.mubr.f32.mxu0 0.0
    %138 = vmatmul.mubr.f32.gmra.mxu0 %v28
    %v139 = vpop.f32.mrf.mxu0
    %v140 = vadd.f32 %v66, %v139
    %v141 = vpop.f32.mrf.mxu0
    %v142 = vadd.f32 %v70, %v141
    %143 = vdwg.mxu0
    %v144 = vmax.f32 %v140, 0.0
    %v145 = vxor.u32 %v142, 2147483648
    %v146 = vmul.f32 %v145, 1.442695
    %v147 = vpow.pop %v146
    %v148 = vadd.f32 %v147, 1.0
    %v149 = vrcp.pop %v148
    %v150 = vmul.f32 1.0, %v149
    %v151 = vsub.f32 %v144, %v28
    %v152 = vmul.f32 %v150, %v151
    %v153 = vadd.f32 %v28, %v152
    %154 = vst [vmem:[%s3] sm:$0xf] %v153
    // Predicated region
    $region18: #{highway_forward.1} parent=1 // pred_check
      _
    $region19: #{highway_forward.1} parent=1 // pred_check_branch
      %156 = sbr.rel (0) target = $region21
    $region20: #{highway_forward.1} parent=1 // pred_region
      _
    $region21: #{highway_forward.1} parent=1 // pred_fallthru
      _
    // Predicated region
    $region22: #{highway_forward.1} parent=1 // pred_check
      _
    $region23: #{highway_forward.1} parent=1 // pred_check_branch
      %158 = sbr.rel (0) target = $region25
    $region24: #{highway_forward.1} parent=1 // pred_region
      _
    $region25: #{highway_forward.1} parent=1 // pred_fallthru
      _
    %159 = vsyncpa [#allocation3], 1

</llo_original>
